<compile_context>
chip_gen: v6e
topology: v6e:2x2x1
jax: 0.10.0
libtpu: 0.0.40
codegen_flags: <defaults>
</compile_context>

<pallas_src>
import jax
import jax.numpy as jnp
from jax.experimental import pallas as pl
from jax.experimental.pallas import tpu as pltpu


def _round_up(x, m):
    return ((x + m - 1) // m) * m


def _vmem_capacity_bytes():
    """Physical VMEM of the local TPU generation (conservative fallback = v7x)."""
    try:
        return int(pltpu.get_tpu_info().vmem_capacity_bytes)
    except Exception:
        return 64 * 1024 * 1024


def _pick_tile(n_max, c1, c2, itemsize):
    """Samples (lanes) per grid step.

    Big enough to amortize the ~0.35us/step overhead, small enough that the
    double-buffered working set of BOTH tasks stays within a generation-aware
    slice of VMEM (v7x has half the VMEM of v5e/v6e).
    """
    vmem_cap = _vmem_capacity_bytes()
    budget = max(4 * 1024 * 1024, vmem_cap // 4)          # working-set budget
    # Bytes resident in VMEM per lane column:
    #   double-buffered: logits1 + logits2 (native dtype) + targets/wi (2x i32/f32)
    #   single-buffered: the two (1, tile) f32 accumulators.
    per_col = 2 * ((c1 + c2) * itemsize + 4 * 4) + 2 * 4
    t = budget // per_col
    t = max(128, (t // 128) * 128)                        # lane axis: 128-aligned
    t = min(t, 32768)                                     # plenty to hide overhead
    return min(t, _round_up(n_max, 128))


def _fused_wce_kernel(lg1_ref, tg1_ref, wi1_ref,
                      lg2_ref, tg2_ref, wi2_ref,
                      out_ref, num_acc, den_acc):
    t = pl.program_id(0)          # task index (0 / 1)
    r = pl.program_id(1)          # batch-tile index

    @pl.when(r == 0)
    def _init():
        num_acc[...] = jnp.zeros_like(num_acc)
        den_acc[...] = jnp.zeros_like(den_acc)

    def accumulate(lg_ref, tg_ref, wi_ref):
        logits = lg_ref[...].astype(jnp.float32)          # (C, T)  classes on sublanes
        tgt = tg_ref[...]                                 # (1, T)  int32 (-1 for pad)
        wi = wi_ref[...]                                  # (1, T)  w[target], 0 for pad

        # Numerically stable log-softmax along the class (sublane) axis.
        m = jnp.max(logits, axis=0, keepdims=True)        # (1, T)
        z = logits - m
        lse = jnp.log(jnp.sum(jnp.exp(z), axis=0, keepdims=True))   # (1, T)

        # Pick z at the target class via a sublane one-hot reduce.
        cls = jax.lax.broadcasted_iota(jnp.int32, logits.shape, 0)   # (C, T)
        z_t = jnp.sum(jnp.where(cls == tgt, z, 0.0), axis=0, keepdims=True)
        nll = lse - z_t                                   # -log p[target], (1, T)

        num_acc[...] += wi * nll                          # lane-wide partial sums
        den_acc[...] += wi

    @pl.when(t == 0)
    def _task0():
        accumulate(lg1_ref, tg1_ref, wi1_ref)

    @pl.when(t == 1)
    def _task1():
        accumulate(lg2_ref, tg2_ref, wi2_ref)

    @pl.when(r == pl.num_programs(1) - 1)
    def _finalize():
        num = jnp.sum(num_acc[...])                       # single lane reduce
        den = jnp.sum(den_acc[...])
        out_ref[...] = jnp.full(out_ref.shape, num / den, dtype=out_ref.dtype)


def gradnorm_losses(logits1, targets1, weights1, logits2, targets2, weights2):
    n1, c1 = logits1.shape
    n2, c2 = logits2.shape
    itemsize = max(jnp.dtype(logits1.dtype).itemsize,
                   jnp.dtype(logits2.dtype).itemsize)
    n_max = max(n1, n2)
    tile = _pick_tile(n_max, c1, c2, itemsize)
    n_pad = _round_up(n_max, tile)

    def prep(logits, targets, weights):
        n, c = logits.shape
        w = jnp.asarray(weights, jnp.float32)
        tgt = targets.astype(jnp.int32)
        # Batch-on-lanes: (C, N_pad), classes on sublanes, samples on lanes.
        lg = jnp.zeros((c, n_pad), dtype=logits.dtype).at[:, :n].set(logits.T)
        tg = jnp.full((1, n_pad), -1, dtype=jnp.int32).at[0, :n].set(tgt)
        wi = jnp.zeros((1, n_pad), dtype=jnp.float32).at[0, :n].set(w[tgt])
        return lg, tg, wi

    lg1, tg1, wi1 = prep(logits1, targets1, weights1)
    lg2, tg2, wi2 = prep(logits2, targets2, weights2)

    vmem_cap = _vmem_capacity_bytes()
    vmem_limit = min(64 * 1024 * 1024, (vmem_cap * 3) // 4)   # 48 MiB on v7x, 64 MiB on v5e/v6e

    # While the other task runs, this task's block index is pinned to 0 so its
    # (stale) tile is not re-fetched: r*(1-t) for task 0, r*t for task 1.
    out = pl.pallas_call(
        _fused_wce_kernel,
        out_shape=jax.ShapeDtypeStruct((2, 1, 128), jnp.float32),
        grid_spec=pltpu.PrefetchScalarGridSpec(
            num_scalar_prefetch=0,
            grid=(2, n_pad // tile),
            in_specs=[
                pl.BlockSpec((c1, tile), lambda t, r: (0, r * (1 - t))),
                pl.BlockSpec((1, tile), lambda t, r: (0, r * (1 - t))),
                pl.BlockSpec((1, tile), lambda t, r: (0, r * (1 - t))),
                pl.BlockSpec((c2, tile), lambda t, r: (0, r * t)),
                pl.BlockSpec((1, tile), lambda t, r: (0, r * t)),
                pl.BlockSpec((1, tile), lambda t, r: (0, r * t)),
            ],
            out_specs=pl.BlockSpec((1, 1, 128), lambda t, r: (t, 0, 0)),
            scratch_shapes=[pltpu.VMEM((1, tile), jnp.float32),
                            pltpu.VMEM((1, tile), jnp.float32)],
        ),
        compiler_params=pltpu.CompilerParams(
            dimension_semantics=("parallel", "arbitrary"),
            vmem_limit_bytes=vmem_limit,
        ),
    )(lg1, tg1, wi1, lg2, tg2, wi2)
    return out[:, 0, 0]   # (2,) stacked losses


class GradNorm:
    """JAX/Pallas equivalent of the PyTorch GradNorm module (forward only)."""

    def __init__(self, weights1, weights2):
        self.weights1 = jnp.asarray(weights1, dtype=jnp.float32)
        self.weights2 = jnp.asarray(weights2, dtype=jnp.float32)

    def __call__(self, logits1, targets1, logits2, targets2):
        return gradnorm_losses(logits1, targets1, self.weights1,
                               logits2, targets2, self.weights2)


if __name__ == "__main__":
    key = jax.random.PRNGKey(0)
    k1, k2, k3, k4 = jax.random.split(key, 4)

    N = 8          # batch
    C1 = 8         # classes for task 1
    C2 = 4         # classes for task 2

    # Deterministic per-class weights (synthetic "parameters" of the module).
    weights1 = jnp.linspace(0.5, 1.5, C1, dtype=jnp.float32)
    weights2 = jnp.linspace(1.0, 2.0, C2, dtype=jnp.float32)

    logits1 = jax.random.normal(k1, (N, C1), dtype=jnp.float32)
    targets1 = jax.random.randint(k2, (N,), 0, C1, dtype=jnp.int32)
    logits2 = jax.random.normal(k3, (N, C2), dtype=jnp.float32)
    targets2 = jax.random.randint(k4, (N,), 0, C2, dtype=jnp.int32)

    model = GradNorm(weights1, weights2)
    out = model(logits1, targets1, logits2, targets2)
    out = jax.block_until_ready(out)

    # Pure-JAX reference (same math, no Pallas).
    def ref_ce(logits, targets, w):
        logp = jax.nn.log_softmax(logits, axis=-1)
        nll = -jnp.take_along_axis(logp, targets[:, None], axis=-1)[:, 0]
        wi = w[targets]
        return jnp.sum(wi * nll) / jnp.sum(wi)

    ref = jnp.stack((ref_ce(logits1, targets1, weights1),
                     ref_ce(logits2, targets2, weights2)))
    assert out.shape == (2,)
    assert jnp.allclose(out, ref, rtol=1e-5, atol=1e-5), (out, ref)

    print("KERNEL_OK")
</pallas_src>

<mosaic_0001>
module attributes {stable_mosaic.version = 11 : i64} {
  func.func @_fused_wce_kernel(%arg0: i32, %arg1: i32, %arg2: memref<8x128xf32, #tpu.memory_space<vmem>>, %arg3: memref<1x128xi32, #tpu.memory_space<vmem>>, %arg4: memref<1x128xf32, #tpu.memory_space<vmem>>, %arg5: memref<4x128xf32, #tpu.memory_space<vmem>>, %arg6: memref<1x128xi32, #tpu.memory_space<vmem>>, %arg7: memref<1x128xf32, #tpu.memory_space<vmem>>, %arg8: memref<1x1x128xf32, #tpu.memory_space<vmem>>, %arg9: memref<1x128xf32, #tpu.memory_space<vmem>>, %arg10: memref<1x128xf32, #tpu.memory_space<vmem>>) attributes {dimension_semantics = [#tpu.dimension_semantics<parallel>, #tpu.dimension_semantics<arbitrary>], iteration_bounds = array<i64: 2, 1>, scalar_prefetch = 0 : i64, scratch_operands = 2 : i64, tpu.core_type = #tpu.core_type<tc>, window_params = [{transform_indices = @transform_0, window_bounds = array<i64: 8, 128>}, {transform_indices = @transform_1, window_bounds = array<i64: 1, 128>}, {transform_indices = @transform_2, window_bounds = array<i64: 1, 128>}, {transform_indices = @transform_3, window_bounds = array<i64: 4, 128>}, {transform_indices = @transform_4, window_bounds = array<i64: 1, 128>}, {transform_indices = @transform_5, window_bounds = array<i64: 1, 128>}, {transform_indices = @transform_6, window_bounds = array<i64: 1, 1, 128>}]} {
    %c0_i32 = arith.constant 0 : i32
    %0 = arith.cmpi eq, %arg1, %c0_i32 : i32
    %1 = arith.extui %0 : i1 to i32
    %c0_i32_0 = arith.constant 0 : i32
    %2 = arith.cmpi ne, %1, %c0_i32_0 : i32
    scf.if %2 {
      %cst = arith.constant 0.000000e+00 : f32
      %12 = vector.broadcast %cst : f32 to vector<1x128xf32>
      %c0 = arith.constant 0 : index
      %c0_6 = arith.constant 0 : index
      %13 = vector.load %arg9[%c0, %c0_6] : memref<1x128xf32, #tpu.memory_space<vmem>>, vector<1x128xf32>
      tpu.vector_store %arg9[%c0, %c0_6], %12 {strides = array<i32>} : memref<1x128xf32, #tpu.memory_space<vmem>>, vector<1x128xf32>,
      %cst_7 = arith.constant 0.000000e+00 : f32
      %14 = vector.broadcast %cst_7 : f32 to vector<1x128xf32>
      %c0_8 = arith.constant 0 : index
      %c0_9 = arith.constant 0 : index
      %15 = vector.load %arg10[%c0_8, %c0_9] : memref<1x128xf32, #tpu.memory_space<vmem>>, vector<1x128xf32>
      tpu.vector_store %arg10[%c0_8, %c0_9], %14 {strides = array<i32>} : memref<1x128xf32, #tpu.memory_space<vmem>>, vector<1x128xf32>,
    } else {
    }
    %c0_i32_1 = arith.constant 0 : i32
    %3 = arith.cmpi eq, %arg0, %c0_i32_1 : i32
    %4 = arith.extui %3 : i1 to i32
    %c0_i32_2 = arith.constant 0 : i32
    %5 = arith.cmpi ne, %4, %c0_i32_2 : i32
    scf.if %5 {
      %c0 = arith.constant 0 : index
      %c0_6 = arith.constant 0 : index
      %12 = vector.load %arg2[%c0, %c0_6] : memref<8x128xf32, #tpu.memory_space<vmem>>, vector<8x128xf32>
      %c0_7 = arith.constant 0 : index
      %c0_8 = arith.constant 0 : index
      %13 = vector.load %arg3[%c0_7, %c0_8] : memref<1x128xi32, #tpu.memory_space<vmem>>, vector<1x128xi32>
      %c0_9 = arith.constant 0 : index
      %c0_10 = arith.constant 0 : index
      %14 = vector.load %arg4[%c0_9, %c0_10] : memref<1x128xf32, #tpu.memory_space<vmem>>, vector<1x128xf32>
      %cst = arith.constant dense<0xFF800000> : vector<128xf32>
      %15 = vector.multi_reduction <maximumf>, %12, %cst [0] : vector<8x128xf32> to vector<128xf32>
      %16 = vector.shape_cast %15 : vector<128xf32> to vector<1x128xf32>
      %17 = vector.broadcast %16 : vector<1x128xf32> to vector<8x128xf32>
      %18 = arith.subf %12, %17 : vector<8x128xf32>
      %19 = math.exp %18 : vector<8x128xf32>
      %cst_11 = arith.constant dense<0.000000e+00> : vector<128xf32>
      %20 = vector.multi_reduction <add>, %19, %cst_11 [0] : vector<8x128xf32> to vector<128xf32>
      %21 = vector.shape_cast %20 : vector<128xf32> to vector<1x128xf32>
      %22 = math.log %21 : vector<1x128xf32>
      %23 = tpu.iota {dimensions = array<i32: 0>} : vector<8x128xi32>
      %24 = vector.broadcast %13 : vector<1x128xi32> to vector<8x128xi32>
      %25 = arith.cmpi eq, %23, %24 : vector<8x128xi32>
      %cst_12 = arith.constant 0.000000e+00 : f32
      %26 = vector.broadcast %cst_12 : f32 to vector<8x128xf32>
      %27 = arith.select %25, %18, %26 : vector<8x128xi1>, vector<8x128xf32>
      %cst_13 = arith.constant dense<0.000000e+00> : vector<128xf32>
      %28 = vector.multi_reduction <add>, %27, %cst_13 [0] : vector<8x128xf32> to vector<128xf32>
      %29 = vector.shape_cast %28 : vector<128xf32> to vector<1x128xf32>
      %30 = arith.subf %22, %29 : vector<1x128xf32>
      %c0_14 = arith.constant 0 : index
      %c0_15 = arith.constant 0 : index
      %31 = vector.load %arg9[%c0_14, %c0_15] : memref<1x128xf32, #tpu.memory_space<vmem>>, vector<1x128xf32>
      %32 = arith.mulf %14, %30 : vector<1x128xf32>
      %33 = arith.addf %31, %32 : vector<1x128xf32>
      %c0_16 = arith.constant 0 : index
      %c0_17 = arith.constant 0 : index
      %34 = vector.load %arg9[%c0_16, %c0_17] : memref<1x128xf32, #tpu.memory_space<vmem>>, vector<1x128xf32>
      tpu.vector_store %arg9[%c0_16, %c0_17], %33 {strides = array<i32>} : memref<1x128xf32, #tpu.memory_space<vmem>>, vector<1x128xf32>,
      %c0_18 = arith.constant 0 : index
      %c0_19 = arith.constant 0 : index
      %35 = vector.load %arg10[%c0_18, %c0_19] : memref<1x128xf32, #tpu.memory_space<vmem>>, vector<1x128xf32>
      %36 = arith.addf %35, %14 : vector<1x128xf32>
      %c0_20 = arith.constant 0 : index
      %c0_21 = arith.constant 0 : index
      %37 = vector.load %arg10[%c0_20, %c0_21] : memref<1x128xf32, #tpu.memory_space<vmem>>, vector<1x128xf32>
      tpu.vector_store %arg10[%c0_20, %c0_21], %36 {strides = array<i32>} : memref<1x128xf32, #tpu.memory_space<vmem>>, vector<1x128xf32>,
    } else {
    }
    %c1_i32 = arith.constant 1 : i32
    %6 = arith.cmpi eq, %arg0, %c1_i32 : i32
    %7 = arith.extui %6 : i1 to i32
    %c0_i32_3 = arith.constant 0 : i32
    %8 = arith.cmpi ne, %7, %c0_i32_3 : i32
    scf.if %8 {
      %c0 = arith.constant 0 : index
      %c0_6 = arith.constant 0 : index
      %12 = vector.load %arg5[%c0, %c0_6] : memref<4x128xf32, #tpu.memory_space<vmem>>, vector<4x128xf32>
      %c0_7 = arith.constant 0 : index
      %c0_8 = arith.constant 0 : index
      %13 = vector.load %arg6[%c0_7, %c0_8] : memref<1x128xi32, #tpu.memory_space<vmem>>, vector<1x128xi32>
      %c0_9 = arith.constant 0 : index
      %c0_10 = arith.constant 0 : index
      %14 = vector.load %arg7[%c0_9, %c0_10] : memref<1x128xf32, #tpu.memory_space<vmem>>, vector<1x128xf32>
      %cst = arith.constant dense<0xFF800000> : vector<128xf32>
      %15 = vector.multi_reduction <maximumf>, %12, %cst [0] : vector<4x128xf32> to vector<128xf32>
      %16 = vector.shape_cast %15 : vector<128xf32> to vector<1x128xf32>
      %17 = vector.broadcast %16 : vector<1x128xf32> to vector<4x128xf32>
      %18 = arith.subf %12, %17 : vector<4x128xf32>
      %19 = math.exp %18 : vector<4x128xf32>
      %cst_11 = arith.constant dense<0.000000e+00> : vector<128xf32>
      %20 = vector.multi_reduction <add>, %19, %cst_11 [0] : vector<4x128xf32> to vector<128xf32>
      %21 = vector.shape_cast %20 : vector<128xf32> to vector<1x128xf32>
      %22 = math.log %21 : vector<1x128xf32>
      %23 = tpu.iota {dimensions = array<i32: 0>} : vector<4x128xi32>
      %24 = vector.broadcast %13 : vector<1x128xi32> to vector<4x128xi32>
      %25 = arith.cmpi eq, %23, %24 : vector<4x128xi32>
      %cst_12 = arith.constant 0.000000e+00 : f32
      %26 = vector.broadcast %cst_12 : f32 to vector<4x128xf32>
      %27 = arith.select %25, %18, %26 : vector<4x128xi1>, vector<4x128xf32>
      %cst_13 = arith.constant dense<0.000000e+00> : vector<128xf32>
      %28 = vector.multi_reduction <add>, %27, %cst_13 [0] : vector<4x128xf32> to vector<128xf32>
      %29 = vector.shape_cast %28 : vector<128xf32> to vector<1x128xf32>
      %30 = arith.subf %22, %29 : vector<1x128xf32>
      %c0_14 = arith.constant 0 : index
      %c0_15 = arith.constant 0 : index
      %31 = vector.load %arg9[%c0_14, %c0_15] : memref<1x128xf32, #tpu.memory_space<vmem>>, vector<1x128xf32>
      %32 = arith.mulf %14, %30 : vector<1x128xf32>
      %33 = arith.addf %31, %32 : vector<1x128xf32>
      %c0_16 = arith.constant 0 : index
      %c0_17 = arith.constant 0 : index
      %34 = vector.load %arg9[%c0_16, %c0_17] : memref<1x128xf32, #tpu.memory_space<vmem>>, vector<1x128xf32>
      tpu.vector_store %arg9[%c0_16, %c0_17], %33 {strides = array<i32>} : memref<1x128xf32, #tpu.memory_space<vmem>>, vector<1x128xf32>,
      %c0_18 = arith.constant 0 : index
      %c0_19 = arith.constant 0 : index
      %35 = vector.load %arg10[%c0_18, %c0_19] : memref<1x128xf32, #tpu.memory_space<vmem>>, vector<1x128xf32>
      %36 = arith.addf %35, %14 : vector<1x128xf32>
      %c0_20 = arith.constant 0 : index
      %c0_21 = arith.constant 0 : index
      %37 = vector.load %arg10[%c0_20, %c0_21] : memref<1x128xf32, #tpu.memory_space<vmem>>, vector<1x128xf32>
      tpu.vector_store %arg10[%c0_20, %c0_21], %36 {strides = array<i32>} : memref<1x128xf32, #tpu.memory_space<vmem>>, vector<1x128xf32>,
    } else {
    }
    %c0_i32_4 = arith.constant 0 : i32
    %9 = arith.cmpi eq, %arg1, %c0_i32_4 : i32
    %10 = arith.extui %9 : i1 to i32
    %c0_i32_5 = arith.constant 0 : i32
    %11 = arith.cmpi ne, %10, %c0_i32_5 : i32
    scf.if %11 {
      %c0 = arith.constant 0 : index
      %c0_6 = arith.constant 0 : index
      %12 = vector.load %arg9[%c0, %c0_6] : memref<1x128xf32, #tpu.memory_space<vmem>>, vector<1x128xf32>
      %13 = vector.shape_cast %12 : vector<1x128xf32> to vector<1x1x128xf32>
      %cst = arith.constant dense<0.000000e+00> : vector<1xf32>
      %14 = vector.multi_reduction <add>, %13, %cst [1, 2] : vector<1x1x128xf32> to vector<1xf32>
      %15 = vector.shape_cast %14 : vector<1xf32> to vector<1x1x1xf32>
      %16 = vector.extract %15[0, 0, 0] : f32 from vector<1x1x1xf32>
      %c0_7 = arith.constant 0 : index
      %c0_8 = arith.constant 0 : index
      %17 = vector.load %arg10[%c0_7, %c0_8] : memref<1x128xf32, #tpu.memory_space<vmem>>, vector<1x128xf32>
      %18 = vector.shape_cast %17 : vector<1x128xf32> to vector<1x1x128xf32>
      %cst_9 = arith.constant dense<0.000000e+00> : vector<1xf32>
      %19 = vector.multi_reduction <add>, %18, %cst_9 [1, 2] : vector<1x1x128xf32> to vector<1xf32>
      %20 = vector.shape_cast %19 : vector<1xf32> to vector<1x1x1xf32>
      %21 = vector.extract %20[0, 0, 0] : f32 from vector<1x1x1xf32>
      %22 = arith.divf %16, %21 : f32
      %23 = vector.broadcast %22 : f32 to vector<1x1x128xf32>
      %c0_10 = arith.constant 0 : index
      %c0_11 = arith.constant 0 : index
      %c0_12 = arith.constant 0 : index
      %24 = vector.load %arg8[%c0_10, %c0_11, %c0_12] : memref<1x1x128xf32, #tpu.memory_space<vmem>>, vector<1x1x128xf32>
      tpu.vector_store %arg8[%c0_10, %c0_11, %c0_12], %23 {strides = array<i32>} : memref<1x1x128xf32, #tpu.memory_space<vmem>>, vector<1x1x128xf32>,
    } else {
    }
    return
  }
  func.func @transform_0(%arg0: i32, %arg1: i32) -> (i32, i32) {
    %c1_i32 = arith.constant 1 : i32
    %0 = arith.subi %c1_i32, %arg0 : i32
    %1 = arith.muli %arg1, %0 : i32
    %c0_i32 = arith.constant 0 : i32
    %c0_i32_0 = arith.constant 0 : i32
    return %c0_i32, %1 : i32, i32
  }
  func.func @transform_1(%arg0: i32, %arg1: i32) -> (i32, i32) {
    %c1_i32 = arith.constant 1 : i32
    %0 = arith.subi %c1_i32, %arg0 : i32
    %1 = arith.muli %arg1, %0 : i32
    %c0_i32 = arith.constant 0 : i32
    %c0_i32_0 = arith.constant 0 : i32
    return %c0_i32, %1 : i32, i32
  }
  func.func @transform_2(%arg0: i32, %arg1: i32) -> (i32, i32) {
    %c1_i32 = arith.constant 1 : i32
    %0 = arith.subi %c1_i32, %arg0 : i32
    %1 = arith.muli %arg1, %0 : i32
    %c0_i32 = arith.constant 0 : i32
    %c0_i32_0 = arith.constant 0 : i32
    return %c0_i32, %1 : i32, i32
  }
  func.func @transform_3(%arg0: i32, %arg1: i32) -> (i32, i32) {
    %0 = arith.muli %arg1, %arg0 : i32
    %c0_i32 = arith.constant 0 : i32
    %c0_i32_0 = arith.constant 0 : i32
    return %c0_i32, %0 : i32, i32
  }
  func.func @transform_4(%arg0: i32, %arg1: i32) -> (i32, i32) {
    %0 = arith.muli %arg1, %arg0 : i32
    %c0_i32 = arith.constant 0 : i32
    %c0_i32_0 = arith.constant 0 : i32
    return %c0_i32, %0 : i32, i32
  }
  func.func @transform_5(%arg0: i32, %arg1: i32) -> (i32, i32) {
    %0 = arith.muli %arg1, %arg0 : i32
    %c0_i32 = arith.constant 0 : i32
    %c0_i32_0 = arith.constant 0 : i32
    return %c0_i32, %0 : i32, i32
  }
  func.func @transform_6(%arg0: i32, %arg1: i32) -> (i32, i32, i32) {
    %c0_i32 = arith.constant 0 : i32
    %c0_i32_0 = arith.constant 0 : i32
    %c0_i32_1 = arith.constant 0 : i32
    return %arg0, %c0_i32, %c0_i32_0 : i32, i32, i32
  }
}

</mosaic_0001>

<llo_original>
// kernel: tpu_custom_call.1
$region0: #{tpu_custom_call.1}
  #allocation0 [shape = 'u32[]', space=smem, size = 0x4, offset = 0x4, fixed_abs, tag = 'smem constant byte address 0x4 - core index']
  #allocation1 [shape = 'u32[144,128]{1,0:T(1,128)}', space=vmem, size = 0x12000, scoped, tag = 'internal scratch']
  #allocation2 [shape = 'f32[1,128]{1,0:T(1,128)}', space=vmem, size = 0x200, scoped, tag = 'scratch operand']
  #allocation3 [shape = 'f32[1,128]{1,0:T(1,128)}', space=vmem, size = 0x200, scoped, tag = 'scratch operand']
  %s0 = inlined_call_operand.hbm [shape: f32[8,128], index: 0, kind: input, shape index: {}]
  %s1 = inlined_call_operand.vmem [shape: s32[1,128], index: 1, kind: input, shape index: {}]
  %s2 = inlined_call_operand.hbm [shape: f32[1,128], index: 2, kind: input, shape index: {}]
  %s3 = inlined_call_operand.vmem [shape: f32[4,128], index: 3, kind: input, shape index: {}]
  %s4 = inlined_call_operand.vmem [shape: s32[1,128], index: 4, kind: input, shape index: {}]
  %s5 = inlined_call_operand.vmem [shape: f32[1,128], index: 5, kind: input, shape index: {}]
  %s6 = inlined_call_operand.hbm [shape: f32[2,1,128], index: 6, kind: output, shape index: {}]
  %s7 = sld [smem:[#allocation0]]
  $region81: #{tpu_custom_call.1} parent=0
    _
  %s9 = ssub.s32 1, %s7
  %s10 = scalar_select 0, %s9, %s7
  $region1: #{tpu_custom_call.1} parent=0
    #allocation4 [shape = 'u8[8192]{0}', space=vmem, size = 0x2000, scoped, tag = 'input window, operand 0']
    #allocation5 [shape = 's32[2]{0}', space=sflag, size = 0x8, scoped, tag = 'scoped memory for tpu_custom_call.1']
    #allocation6 [shape = 's32[2]{0}', space=sflag, size = 0x8, scoped, tag = 'scoped memory for tpu_custom_call.1']
    #allocation7 [shape = 'u8[1024]{0}', space=vmem, size = 0x400, scoped, tag = 'input window, operand 2']
    #allocation8 [shape = 's32[2]{0}', space=sflag, size = 0x8, scoped, tag = 'scoped memory for tpu_custom_call.1']
    #allocation9 [shape = 'u8[1024]{0}', space=vmem, size = 0x400, scoped, tag = 'output window, operand 0']
    %11 = vsyncpa [#allocation5], 0
    %s12 = scalar_lea.sflag [#allocation5], 1
    %13 = vsyncpa %s12, 0
    %14 = vsyncpa [#allocation8], 0
    %s15 = scalar_lea.sflag [#allocation8], 1
    %16 = vsyncpa %s15, 0
    %17 = vsyncpa [#allocation6], 0
    %s18 = scalar_lea.sflag [#allocation6], 1
    %19 = vsyncpa %s18, 0
    loop: start=0, step=1, limit=4
    $region2: #{tpu_custom_call.1} parent=1 // loop_pre_header
      _
    $region3: #{tpu_custom_call.1} parent=1 // loop_header
      %s21 = sphi 0, %s25
      %p22 = scmp.ge.s32.totalorder %s21, 4
      %s28 = sphi 0, %s40
      %s29 = sphi 0, %s36
      %s30 = sphi 0, %s28
      %s31 = sphi 0, %s29
      %s32 = sphi 0, %s30
      %s33 = sphi 0, %s31
      %s47 = sphi 0, %s49
      %s50 = sphi 0, %s47
      %s51 = sphi 0, %s50
      %s67 = sphi 0, %s51
      %s77 = sphi 0, %s79
      %s80 = sphi 0, %s77
      %s81 = sphi 0, %s80
      %s97 = sphi 0, %s81
      %s107 = sphi 0, %s109
      %s110 = sphi 0, %s107
      %s111 = sphi 0, %s110
      %s127 = sphi 0, %s111
      %s135 = sphi 0, %s137
      %s138 = sphi 0, %s135
      %s139 = sphi 0, %s138
      %s155 = sphi 0, %s139
      %s163 = sphi 0, %s165
      %s166 = sphi 0, %s163
      %s167 = sphi 0, %s166
      %s183 = sphi 0, %s167
      %s191 = sphi 0, %s193
      %s194 = sphi 0, %s191
      %s195 = sphi 0, %s194
      %s211 = sphi 0, %s195
      %s217 = sphi 0, %s219
      %s220 = sphi 0, %s217
      %s221 = sphi 0, %s220
      %s237 = sphi 0, %s221
    $region4: #{tpu_custom_call.1} parent=1 // loop_header_branch
      %24 = sbr.rel (%p22) target = $region8
    $region5: #{tpu_custom_call.1} parent=1 // loop_body
      %s26 = ssub.s32 %s21, 1
      %s27 = ssub.s32 %s21, 2
      %s34 = sadd.s32 1, %s29
      %p35 = scmp.ge.s32.totalorder %s34, 1
      %s36 = scalar_select %p35, 0, %s34
      %s37 = sadd.s32 1, %s28
      %s38 = scalar_select %p35, %s37, %s28
      %p39 = scmp.ge.s32.totalorder %s38, 2
      %s40 = scalar_select %p39, 0, %s38
      %s41 = ssub.s32 1, %s28
      %s42 = smul.u32 %s29, %s41
      %s43 = ssub.s32 1, %s40
      %s44 = smul.u32 %s36, %s43
      %s45 = ssub.s32 %s42, %s44
      %p46 = scmp.eq.s32.totalorder %s45, 0
      %s48 = sadd.s32 %s47, 1
      %s49 = scalar_select %p46, %s47, %s48
      %p52 = pneg %p46
      %p53 = scmp.eq.s32.totalorder %s21, 1
      %p54 = por %p52, %p53
      %p55 = scmp.ne.s32.totalorder %s47, %s50
      %p56 = scmp.eq.s32.totalorder %s21, 0
      %p57 = por %p55, %p56
      %p58 = scmp.ne.s32.totalorder %s47, %s50
      %p59 = scmp.eq.s32.totalorder %s26, 1
      %p60 = por %p58, %p59
      %p61 = scmp.ne.s32.totalorder %s50, %s51
      %p62 = scmp.eq.s32.totalorder %s26, 0
      %p63 = por %p61, %p62
      %p64 = scmp.ne.s32.totalorder %s50, %s51
      %p65 = scmp.eq.s32.totalorder %s27, 1
      %p66 = por %p64, %p65
      %p68 = scmp.ne.s32.totalorder %s51, %s67
      %p69 = scmp.eq.s32.totalorder %s27, 0
      %p70 = por %p68, %p69
      %s71 = ssub.s32 1, %s28
      %s72 = smul.u32 %s29, %s71
      %s73 = ssub.s32 1, %s40
      %s74 = smul.u32 %s36, %s73
      %s75 = ssub.s32 %s72, %s74
      %p76 = scmp.eq.s32.totalorder %s75, 0
      %s78 = sadd.s32 %s77, 1
      %s79 = scalar_select %p76, %s77, %s78
      %p82 = pneg %p76
      %p83 = scmp.eq.s32.totalorder %s21, 1
      %p84 = por %p82, %p83
      %p85 = scmp.ne.s32.totalorder %s77, %s80
      %p86 = scmp.eq.s32.totalorder %s21, 0
      %p87 = por %p85, %p86
      %p88 = scmp.ne.s32.totalorder %s77, %s80
      %p89 = scmp.eq.s32.totalorder %s26, 1
      %p90 = por %p88, %p89
      %p91 = scmp.ne.s32.totalorder %s80, %s81
      %p92 = scmp.eq.s32.totalorder %s26, 0
      %p93 = por %p91, %p92
      %p94 = scmp.ne.s32.totalorder %s80, %s81
      %p95 = scmp.eq.s32.totalorder %s27, 1
      %p96 = por %p94, %p95
      %p98 = scmp.ne.s32.totalorder %s81, %s97
      %p99 = scmp.eq.s32.totalorder %s27, 0
      %p100 = por %p98, %p99
      %s101 = ssub.s32 1, %s28
      %s102 = smul.u32 %s29, %s101
      %s103 = ssub.s32 1, %s40
      %s104 = smul.u32 %s36, %s103
      %s105 = ssub.s32 %s102, %s104
      %p106 = scmp.eq.s32.totalorder %s105, 0
      %s108 = sadd.s32 %s107, 1
      %s109 = scalar_select %p106, %s107, %s108
      %p112 = pneg %p106
      %p113 = scmp.eq.s32.totalorder %s21, 1
      %p114 = por %p112, %p113
      %p115 = scmp.ne.s32.totalorder %s107, %s110
      %p116 = scmp.eq.s32.totalorder %s21, 0
      %p117 = por %p115, %p116
      %p118 = scmp.ne.s32.totalorder %s107, %s110
      %p119 = scmp.eq.s32.totalorder %s26, 1
      %p120 = por %p118, %p119
      %p121 = scmp.ne.s32.totalorder %s110, %s111
      %p122 = scmp.eq.s32.totalorder %s26, 0
      %p123 = por %p121, %p122
      %p124 = scmp.ne.s32.totalorder %s110, %s111
      %p125 = scmp.eq.s32.totalorder %s27, 1
      %p126 = por %p124, %p125
      %p128 = scmp.ne.s32.totalorder %s111, %s127
      %p129 = scmp.eq.s32.totalorder %s27, 0
      %p130 = por %p128, %p129
      %s131 = smul.u32 %s29, %s28
      %s132 = smul.u32 %s36, %s40
      %s133 = ssub.s32 %s131, %s132
      %p134 = scmp.eq.s32.totalorder %s133, 0
      %s136 = sadd.s32 %s135, 1
      %s137 = scalar_select %p134, %s135, %s136
      %p140 = pneg %p134
      %p141 = scmp.eq.s32.totalorder %s21, 1
      %p142 = por %p140, %p141
      %p143 = scmp.ne.s32.totalorder %s135, %s138
      %p144 = scmp.eq.s32.totalorder %s21, 0
      %p145 = por %p143, %p144
      %p146 = scmp.ne.s32.totalorder %s135, %s138
      %p147 = scmp.eq.s32.totalorder %s26, 1
      %p148 = por %p146, %p147
      %p149 = scmp.ne.s32.totalorder %s138, %s139
      %p150 = scmp.eq.s32.totalorder %s26, 0
      %p151 = por %p149, %p150
      %p152 = scmp.ne.s32.totalorder %s138, %s139
      %p153 = scmp.eq.s32.totalorder %s27, 1
      %p154 = por %p152, %p153
      %p156 = scmp.ne.s32.totalorder %s139, %s155
      %p157 = scmp.eq.s32.totalorder %s27, 0
      %p158 = por %p156, %p157
      %s159 = smul.u32 %s29, %s28
      %s160 = smul.u32 %s36, %s40
      %s161 = ssub.s32 %s159, %s160
      %p162 = scmp.eq.s32.totalorder %s161, 0
      %s164 = sadd.s32 %s163, 1
      %s165 = scalar_select %p162, %s163, %s164
      %p168 = pneg %p162
      %p169 = scmp.eq.s32.totalorder %s21, 1
      %p170 = por %p168, %p169
      %p171 = scmp.ne.s32.totalorder %s163, %s166
      %p172 = scmp.eq.s32.totalorder %s21, 0
      %p173 = por %p171, %p172
      %p174 = scmp.ne.s32.totalorder %s163, %s166
      %p175 = scmp.eq.s32.totalorder %s26, 1
      %p176 = por %p174, %p175
      %p177 = scmp.ne.s32.totalorder %s166, %s167
      %p178 = scmp.eq.s32.totalorder %s26, 0
      %p179 = por %p177, %p178
      %p180 = scmp.ne.s32.totalorder %s166, %s167
      %p181 = scmp.eq.s32.totalorder %s27, 1
      %p182 = por %p180, %p181
      %p184 = scmp.ne.s32.totalorder %s167, %s183
      %p185 = scmp.eq.s32.totalorder %s27, 0
      %p186 = por %p184, %p185
      %s187 = smul.u32 %s29, %s28
      %s188 = smul.u32 %s36, %s40
      %s189 = ssub.s32 %s187, %s188
      %p190 = scmp.eq.s32.totalorder %s189, 0
      %s192 = sadd.s32 %s191, 1
      %s193 = scalar_select %p190, %s191, %s192
      %p196 = pneg %p190
      %p197 = scmp.eq.s32.totalorder %s21, 1
      %p198 = por %p196, %p197
      %p199 = scmp.ne.s32.totalorder %s191, %s194
      %p200 = scmp.eq.s32.totalorder %s21, 0
      %p201 = por %p199, %p200
      %p202 = scmp.ne.s32.totalorder %s191, %s194
      %p203 = scmp.eq.s32.totalorder %s26, 1
      %p204 = por %p202, %p203
      %p205 = scmp.ne.s32.totalorder %s194, %s195
      %p206 = scmp.eq.s32.totalorder %s26, 0
      %p207 = por %p205, %p206
      %p208 = scmp.ne.s32.totalorder %s194, %s195
      %p209 = scmp.eq.s32.totalorder %s27, 1
      %p210 = por %p208, %p209
      %p212 = scmp.ne.s32.totalorder %s195, %s211
      %p213 = scmp.eq.s32.totalorder %s27, 0
      %p214 = por %p212, %p213
      %s215 = ssub.s32 %s28, %s40
      %p216 = scmp.eq.s32.totalorder %s215, 0
      %s218 = sadd.s32 %s217, 1
      %s219 = scalar_select %p216, %s217, %s218
      %p222 = pneg %p216
      %p223 = scmp.eq.s32.totalorder %s21, 1
      %p224 = por %p222, %p223
      %p225 = scmp.ne.s32.totalorder %s217, %s220
      %p226 = scmp.eq.s32.totalorder %s21, 0
      %p227 = por %p225, %p226
      %p228 = scmp.ne.s32.totalorder %s217, %s220
      %p229 = scmp.eq.s32.totalorder %s26, 1
      %p230 = por %p228, %p229
      %p231 = scmp.ne.s32.totalorder %s220, %s221
      %p232 = scmp.eq.s32.totalorder %s26, 0
      %p233 = por %p231, %p232
      %p234 = scmp.ne.s32.totalorder %s220, %s221
      %p235 = scmp.eq.s32.totalorder %s27, 1
      %p236 = por %p234, %p235
      %p238 = scmp.ne.s32.totalorder %s221, %s237
      %p239 = scmp.eq.s32.totalorder %s27, 0
      %p240 = por %p238, %p239
      %p241 = scmp.le.s32.totalorder 1, %s21
      %p242 = scmp.lt.s32.totalorder %s21, 3
      %p243 = pnand %p241, %p242
      %p244 = pneg %p243
      // Predicated region
      $region9: #{tpu_custom_call.1} parent=5 // pred_check
        _
      $region10: #{tpu_custom_call.1} parent=5 // pred_check_branch
        %246 = sbr.rel (%p243) target = $region12
      $region11: #{tpu_custom_call.1} parent=5 // pred_region
        %s247 = ssub.s32 %s21, 1
      $region12: #{tpu_custom_call.1} parent=5 // pred_fallthru
        _
      %p248 = scmp.lt.s32.totalorder %s21, 2
      // Predicated region
      $region13: #{tpu_custom_call.1} parent=5 // pred_check
        %p249 = pneg %p248
      $region14: #{tpu_custom_call.1} parent=5 // pred_check_branch
        %251 = sbr.rel (%p249) target = $region16
      $region15: #{tpu_custom_call.1} parent=5 // pred_region
        // Predicated region
        $region17: #{tpu_custom_call.1} parent=15 // pred_check
          %p252 = pneg %p57
        $region18: #{tpu_custom_call.1} parent=15 // pred_check_branch
          %254 = sbr.rel (%p252) target = $region20
        $region19: #{tpu_custom_call.1} parent=15 // pred_region
          %s255 = sand.u32 %s47, 1
          %s256 = scalar_lea.sflag [#allocation5], %s255
          %s257 = sand.u32 %s47, 1
          %s258 = smul.addr %s257, 8
          %s259 = scalar_lea.vmem [#allocation4], %s258
          %s260 = ssub.s32 1, %s28
          %s261 = smul.u32 %s29, %s260
          %s263 = ssub.s32 128, 128
          %264 = vsyncadd %s256, %s263
          %s265 = smul.addr %s261, 128
          %s266 = scalar_lea.hbm %s0, %s265
          %s268 = sshll.u32 %s259, 4
          %s269 = int_to_ptr.vmem [resolvable:$true] %s268
          %271 = dma.hbm_to_vmem [thread:$0]  %s266, 128, %s269, %s256
        $region20: #{tpu_custom_call.1} parent=15 // pred_fallthru
          _
        // Predicated region
        $region21: #{tpu_custom_call.1} parent=15 // pred_check
          %p272 = pneg %p87
        $region22: #{tpu_custom_call.1} parent=15 // pred_check_branch
          %274 = sbr.rel (%p272) target = $region24
        $region23: #{tpu_custom_call.1} parent=15 // pred_region
          %s275 = ssub.s32 1, %s28
          %s276 = smul.u32 %s29, %s275
          %p277 = scmp.lt.s32.totalorder %s276, 0
          %s278 = scalar_select %p277, %s276, 0
          %s279 = scalar_lea.vmem %s1, %s278
          %s280 = ssub.s32 1, %s28
          %s281 = smul.u32 %s29, %s280
        $region24: #{tpu_custom_call.1} parent=15 // pred_fallthru
          _
        // Predicated region
        $region25: #{tpu_custom_call.1} parent=15 // pred_check
          %p282 = pneg %p117
        $region26: #{tpu_custom_call.1} parent=15 // pred_check_branch
          %284 = sbr.rel (%p282) target = $region28
        $region27: #{tpu_custom_call.1} parent=15 // pred_region
          %s285 = sand.u32 %s107, 1
          %s286 = scalar_lea.sflag [#allocation8], %s285
          %s287 = sand.u32 %s107, 1
          %s288 = scalar_lea.vmem [#allocation7], %s287
          %s289 = ssub.s32 1, %s28
          %s290 = smul.u32 %s29, %s289
          %s292 = ssub.s32 16, 16
          %293 = vsyncadd %s286, %s292
          %s294 = smul.addr %s290, 16
          %s295 = scalar_lea.hbm %s2, %s294
          %s297 = sshll.u32 %s288, 4
          %s298 = int_to_ptr.vmem [resolvable:$true] %s297
          %300 = dma.hbm_to_vmem [thread:$0]  %s295, 16, %s298, %s286
        $region28: #{tpu_custom_call.1} parent=15 // pred_fallthru
          _
        // Predicated region
        $region29: #{tpu_custom_call.1} parent=15 // pred_check
          %p301 = pneg %p145
        $region30: #{tpu_custom_call.1} parent=15 // pred_check_branch
          %303 = sbr.rel (%p301) target = $region32
        $region31: #{tpu_custom_call.1} parent=15 // pred_region
          %s304 = smul.u32 %s29, %s28
          %p305 = scmp.lt.s32.totalorder %s304, 0
          %s306 = scalar_select %p305, %s304, 0
          %s307 = smul.addr %s306, 4
          %s308 = scalar_lea.vmem %s3, %s307
          %s309 = smul.u32 %s29, %s28
        $region32: #{tpu_custom_call.1} parent=15 // pred_fallthru
          _
        // Predicated region
        $region33: #{tpu_custom_call.1} parent=15 // pred_check
          %p310 = pneg %p173
        $region34: #{tpu_custom_call.1} parent=15 // pred_check_branch
          %312 = sbr.rel (%p310) target = $region36
        $region35: #{tpu_custom_call.1} parent=15 // pred_region
          %s313 = smul.u32 %s29, %s28
          %p314 = scmp.lt.s32.totalorder %s313, 0
          %s315 = scalar_select %p314, %s313, 0
          %s316 = scalar_lea.vmem %s4, %s315
          %s317 = smul.u32 %s29, %s28
        $region36: #{tpu_custom_call.1} parent=15 // pred_fallthru
          _
        // Predicated region
        $region37: #{tpu_custom_call.1} parent=15 // pred_check
          %p318 = pneg %p201
        $region38: #{tpu_custom_call.1} parent=15 // pred_check_branch
          %320 = sbr.rel (%p318) target = $region40
        $region39: #{tpu_custom_call.1} parent=15 // pred_region
          %s321 = smul.u32 %s29, %s28
          %p322 = scmp.lt.s32.totalorder %s321, 0
          %s323 = scalar_select %p322, %s321, 0
          %s324 = scalar_lea.vmem %s5, %s323
          %s325 = smul.u32 %s29, %s28
        $region40: #{tpu_custom_call.1} parent=15 // pred_fallthru
          _
      $region16: #{tpu_custom_call.1} parent=5 // pred_fallthru
        _
      %p326 = scmp.le.s32.totalorder 1, %s21
      %p327 = scmp.lt.s32.totalorder %s21, 3
      %p328 = pnand %p326, %p327
      %p329 = pneg %p328
      // Predicated region
      $region41: #{tpu_custom_call.1} parent=5 // pred_check
        _
      $region42: #{tpu_custom_call.1} parent=5 // pred_check_branch
        %331 = sbr.rel (%p328) target = $region44
      $region43: #{tpu_custom_call.1} parent=5 // pred_region
        %s332 = ssub.s32 %s21, 1
        %s333 = sand.u32 %s50, 1
        %s334 = scalar_lea.sflag [#allocation5], %s333
        %s335 = sand.u32 %s50, 1
        %s336 = smul.addr %s335, 8
        %s337 = scalar_lea.vmem [#allocation4], %s336
        // Predicated region
        $region45: #{tpu_custom_call.1} parent=43 // pred_check
          %p338 = pneg %p63
        $region46: #{tpu_custom_call.1} parent=43 // pred_check_branch
          %340 = sbr.rel (%p338) target = $region48
        $region47: #{tpu_custom_call.1} parent=43 // pred_region
          %341 = dma.done %s334, 128
        $region48: #{tpu_custom_call.1} parent=43 // pred_fallthru
          _
        %s342 = sand.u32 %s110, 1
        %s343 = scalar_lea.sflag [#allocation8], %s342
        %s344 = sand.u32 %s110, 1
        %s345 = scalar_lea.vmem [#allocation7], %s344
        // Predicated region
        $region49: #{tpu_custom_call.1} parent=43 // pred_check
          %p346 = pneg %p123
        $region50: #{tpu_custom_call.1} parent=43 // pred_check_branch
          %348 = sbr.rel (%p346) target = $region52
        $region51: #{tpu_custom_call.1} parent=43 // pred_region
          %349 = dma.done %s343, 16
        $region52: #{tpu_custom_call.1} parent=43 // pred_fallthru
          _
        %s350 = sand.u32 %s50, 1
        %s351 = scalar_lea.sflag [#allocation5], %s350
        %s352 = sand.u32 %s50, 1
        %s353 = smul.addr %s352, 8
        %s354 = scalar_lea.vmem [#allocation4], %s353
        %p355 = pneg %p63
        %p356 = pneg %p60
        %s357 = ssub.s32 1, %s30
        %s358 = smul.u32 %s31, %s357
        %p359 = scmp.lt.s32.totalorder %s358, 0
        %s360 = scalar_select %p359, %s358, 0
        %s361 = scalar_lea.vmem %s1, %s360
        %p362 = pneg %p93
        %p363 = pneg %p90
        %s364 = sand.u32 %s110, 1
        %s365 = scalar_lea.sflag [#allocation8], %s364
        %s366 = sand.u32 %s110, 1
        %s367 = scalar_lea.vmem [#allocation7], %s366
        %p368 = pneg %p123
        %p369 = pneg %p120
        %s370 = smul.u32 %s31, %s30
        %p371 = scmp.lt.s32.totalorder %s370, 0
        %s372 = scalar_select %p371, %s370, 0
        %s373 = smul.addr %s372, 4
        %s374 = scalar_lea.vmem %s3, %s373
        %p375 = pneg %p151
        %p376 = pneg %p148
        %s377 = smul.u32 %s31, %s30
        %p378 = scmp.lt.s32.totalorder %s377, 0
        %s379 = scalar_select %p378, %s377, 0
        %s380 = scalar_lea.vmem %s4, %s379
        %p381 = pneg %p179
        %p382 = pneg %p176
        %s383 = smul.u32 %s31, %s30
        %p384 = scmp.lt.s32.totalorder %s383, 0
        %s385 = scalar_select %p384, %s383, 0
        %s386 = scalar_lea.vmem %s5, %s385
        %p387 = pneg %p207
        %p388 = pneg %p204
        %p389 = pneg %p233
        %p390 = pneg %p230
        %s391 = sand.u32 %s220, 1
        %s392 = scalar_lea.sflag [#allocation6], %s391
        %s393 = sand.u32 %s220, 1
        %s394 = scalar_lea.vmem [#allocation9], %s393
        %s395 = ssub.s32 1, %s30
        %s396 = smul.u32 %s31, %s395
        %s397 = ssub.s32 1, %s30
        %s398 = smul.u32 %s31, %s397
        %p399 = scmp.lt.s32.totalorder %s398, 0
        %s400 = scalar_select %p399, %s398, 0
        %s401 = scalar_lea.vmem %s1, %s400
        %s402 = ssub.s32 1, %s30
        %s403 = smul.u32 %s31, %s402
        %s404 = ssub.s32 1, %s30
        %s405 = smul.u32 %s31, %s404
        %s406 = smul.u32 %s31, %s30
        %p407 = scmp.lt.s32.totalorder %s406, 0
        %s408 = scalar_select %p407, %s406, 0
        %s409 = smul.addr %s408, 4
        %s410 = scalar_lea.vmem %s3, %s409
        %s411 = smul.u32 %s31, %s30
        %s412 = smul.u32 %s31, %s30
        %p413 = scmp.lt.s32.totalorder %s412, 0
        %s414 = scalar_select %p413, %s412, 0
        %s415 = scalar_lea.vmem %s4, %s414
        %s416 = smul.u32 %s31, %s30
        %s417 = smul.u32 %s31, %s30
        %p418 = scmp.lt.s32.totalorder %s417, 0
        %s419 = scalar_select %p418, %s417, 0
        %s420 = scalar_lea.vmem %s5, %s419
        %s421 = smul.u32 %s31, %s30
        %p422 = scmp.eq.s32.totalorder %s31, 0
        // Predicated region
        $region53: #{tpu_custom_call.1} parent=43 // pred_check
          %p423 = pneg %p422
        $region54: #{tpu_custom_call.1} parent=43 // pred_check_branch
          %425 = sbr.rel (%p423) target = $region56
        $region55: #{tpu_custom_call.1} parent=43 // pred_region
          %426 = vst [vmem:[#allocation2] sm:$0x1] 0.0
          %427 = vst [vmem:[#allocation3] sm:$0x1] 0.0
        $region56: #{tpu_custom_call.1} parent=43 // pred_fallthru
          _
        %p428 = scmp.eq.s32.totalorder %s30, 0
        // Predicated region
        $region57: #{tpu_custom_call.1} parent=43 // pred_check
          %p429 = pneg %p428
        $region58: #{tpu_custom_call.1} parent=43 // pred_check_branch
          %431 = sbr.rel (%p429) target = $region60
        $region59: #{tpu_custom_call.1} parent=43 // pred_region
          %v432 = vld [vmem:[%s337] sm:$0xff]
          %v433 = vld [vmem:[%s401] sm:$0x1]
          %v434 = vld [vmem:[%s345] sm:$0x1]
          %v435 = vrot.slane %v432, 4
          %v436 = vmax.f32 %v432, %v435
          %v437 = vrot.slane %v436, 2
          %v438 = vmax.f32 %v436, %v437
          %v439 = vrot.slane %v438, 1
          %v440 = vmax.f32 %v438, %v439
          %v441 = vsub.f32 %v432, %v440
          %v442 = vmul.f32 %v441, 1.442695
          %v443 = vpow.pop %v442
          %v444 = vrot.slane %v443, 4
          %v445 = vadd.f32 %v443, %v444
          %v446 = vrot.slane %v445, 2
          %v447 = vadd.f32 %v445, %v446
          %v448 = vrot.slane %v447, 1
          %v449 = vadd.f32 %v447, %v448
          %v450 = vlog2.pop %v449
          %v451 = vmul.f32 %v450, 0.6931472
          %v452 = vlaneseq
          %v453 = vshrl.u32 %v452, 7
          %v454 = vlaneseq
          %v455 = vshrl.u32 %v454, 7
          %v456 = vsub.s32 0, %v455
          %v457 = vrot.slane %v433, %v456
          %vm458 = vcmp.eq.s32.totalorder %v453, %v457
          %v459 = vsel %vm458, %v441, 0.0
          %v460 = vrot.slane %v459, 4
          %v461 = vadd.f32 %v459, %v460
          %v462 = vrot.slane %v461, 2
          %v463 = vadd.f32 %v461, %v462
          %v464 = vrot.slane %v463, 1
          %v465 = vadd.f32 %v463, %v464
          %v466 = vsub.f32 %v451, %v465
          %v467 = vld [vmem:[#allocation2] sm:$0x1]
          %v468 = vmul.f32 %v434, %v466
          %v469 = vadd.f32 %v467, %v468
          %470 = vst [vmem:[#allocation2] sm:$0x1] %v469
          %v471 = vld [vmem:[#allocation3] sm:$0x1]
          %v472 = vadd.f32 %v471, %v434
          %473 = vst [vmem:[#allocation3] sm:$0x1] %v472
        $region60: #{tpu_custom_call.1} parent=43 // pred_fallthru
          _
        %p474 = scmp.eq.s32.totalorder %s30, 1
        // Predicated region
        $region61: #{tpu_custom_call.1} parent=43 // pred_check
          %p475 = pneg %p474
        $region62: #{tpu_custom_call.1} parent=43 // pred_check_branch
          %477 = sbr.rel (%p475) target = $region64
        $region63: #{tpu_custom_call.1} parent=43 // pred_region
          %v478 = vld [vmem:[%s410] sm:$0xf]
          %v479 = vld [vmem:[%s415] sm:$0x1]
          %v480 = vld [vmem:[%s420] sm:$0x1]
          %vm481 = vcmask 1043456
          %v482 = vsel %vm481, %v478, -inf
          %v483 = vrot.slane %v482, 4
          %v484 = vmax.f32 %v482, %v483
          %v485 = vrot.slane %v484, 2
          %v486 = vmax.f32 %v484, %v485
          %v487 = vrot.slane %v486, 1
          %v488 = vmax.f32 %v486, %v487
          %v489 = vsub.f32 %v478, %v488
          %v490 = vmul.f32 %v489, 1.442695
          %v491 = vpow.pop %v490
          %v492 = vsel %vm481, %v491, 0.0
          %v493 = vrot.slane %v492, 4
          %v494 = vadd.f32 %v492, %v493
          %v495 = vrot.slane %v494, 2
          %v496 = vadd.f32 %v494, %v495
          %v497 = vrot.slane %v496, 1
          %v498 = vadd.f32 %v496, %v497
          %v499 = vlog2.pop %v498
          %v500 = vmul.f32 %v499, 0.6931472
          %v501 = vlaneseq
          %v502 = vshrl.u32 %v501, 7
          %v503 = vlaneseq
          %v504 = vshrl.u32 %v503, 7
          %v505 = vsub.s32 0, %v504
          %v506 = vrot.slane %v479, %v505
          %vm507 = vcmp.eq.s32.totalorder %v502, %v506
          %v508 = vsel %vm507, %v489, 0.0
          %v509 = vsel %vm481, %v508, 0.0
          %v510 = vrot.slane %v509, 4
          %v511 = vadd.f32 %v509, %v510
          %v512 = vrot.slane %v511, 2
          %v513 = vadd.f32 %v511, %v512
          %v514 = vrot.slane %v513, 1
          %v515 = vadd.f32 %v513, %v514
          %v516 = vsub.f32 %v500, %v515
          %v517 = vld [vmem:[#allocation2] sm:$0x1]
          %v518 = vmul.f32 %v480, %v516
          %v519 = vadd.f32 %v517, %v518
          %520 = vst [vmem:[#allocation2] sm:$0x1] %v519
          %v521 = vld [vmem:[#allocation3] sm:$0x1]
          %v522 = vadd.f32 %v521, %v480
          %523 = vst [vmem:[#allocation3] sm:$0x1] %v522
        $region64: #{tpu_custom_call.1} parent=43 // pred_fallthru
          _
        // Predicated region
        $region65: #{tpu_custom_call.1} parent=43 // pred_check
          %p524 = pneg %p422
        $region66: #{tpu_custom_call.1} parent=43 // pred_check_branch
          %526 = sbr.rel (%p524) target = $region68
        $region67: #{tpu_custom_call.1} parent=43 // pred_region
          %v527 = vld [vmem:[#allocation2] sm:$0x1]
          %vm528 = vcmask 1040384
          %v529 = vsel %vm528, %v527, 0.0
          %530 = vadd.xlane.f32.xlu0 %v529
          %v531 = vpop.xlane.xlu0 %530
          %v532 = vrot.slane %v531, 4
          %v533 = vadd.f32 %v531, %v532
          %v534 = vrot.slane %v533, 2
          %v535 = vadd.f32 %v533, %v534
          %v536 = vrot.slane %v535, 1
          %v537 = vadd.f32 %v535, %v536
          %s538 = vtos %v537
          %v539 = vld [vmem:[#allocation3] sm:$0x1]
          %v540 = vsel %vm528, %v539, 0.0
          %541 = vadd.xlane.f32.xlu0 %v540
          %v542 = vpop.xlane.xlu0 %541
          %v543 = vrot.slane %v542, 4
          %v544 = vadd.f32 %v542, %v543
          %v545 = vrot.slane %v544, 2
          %v546 = vadd.f32 %v544, %v545
          %v547 = vrot.slane %v546, 1
          %v548 = vadd.f32 %v546, %v547
          %s549 = vtos %v548
          %v550 = vstv %s549
          %v551 = vrcp.pop %v550
          %s552 = vtos %v551
          %s553 = smul.f32 %s538, %s552
          %v554 = vstv %s553
          %555 = vst [vmem:[%s394] sm:$0x1] %v554
        $region68: #{tpu_custom_call.1} parent=43 // pred_fallthru
          _
        %s556 = sand.u32 %s220, 1
        %s557 = scalar_lea.sflag [#allocation6], %s556
        %s558 = sand.u32 %s220, 1
        %s559 = scalar_lea.vmem [#allocation9], %s558
        // Predicated region
        $region69: #{tpu_custom_call.1} parent=43 // pred_check
          %p560 = pneg %p230
        $region70: #{tpu_custom_call.1} parent=43 // pred_check_branch
          %562 = sbr.rel (%p560) target = $region72
        $region71: #{tpu_custom_call.1} parent=43 // pred_region
          %s564 = ssub.s32 16, 16
          %565 = vsyncadd %s557, %s564
          %s566 = smul.addr %s30, 16
          %s567 = scalar_lea.hbm %s6, %s566
          %s569 = sshll.u32 %s559, 4
          %s570 = int_to_ptr.vmem [resolvable:$true] %s569
          %572 = dma.vmem_to_hbm [thread:$0]  %s570, 16, %s567, %s557
        $region72: #{tpu_custom_call.1} parent=43 // pred_fallthru
          _
      $region44: #{tpu_custom_call.1} parent=5 // pred_fallthru
        _
      %p573 = scmp.le.s32.totalorder 2, %s21
      // Predicated region
      $region73: #{tpu_custom_call.1} parent=5 // pred_check
        %p574 = pneg %p573
      $region74: #{tpu_custom_call.1} parent=5 // pred_check_branch
        %576 = sbr.rel (%p574) target = $region76
      $region75: #{tpu_custom_call.1} parent=5 // pred_region
        %s577 = ssub.s32 %s21, 2
        // Predicated region
        $region77: #{tpu_custom_call.1} parent=75 // pred_check
          %p578 = pneg %p236
        $region78: #{tpu_custom_call.1} parent=75 // pred_check_branch
          %580 = sbr.rel (%p578) target = $region80
        $region79: #{tpu_custom_call.1} parent=75 // pred_region
          %s581 = sand.u32 %s221, 1
          %s582 = scalar_lea.sflag [#allocation6], %s581
          %s583 = sand.u32 %s221, 1
          %s584 = scalar_lea.vmem [#allocation9], %s583
          %585 = dma.done %s582, 16
        $region80: #{tpu_custom_call.1} parent=75 // pred_fallthru
          _
      $region76: #{tpu_custom_call.1} parent=5 // pred_fallthru
        _
    $region6: #{tpu_custom_call.1} parent=1 // loop_footer
      %s25 = sadd.s32 1, %s21
    $region7: #{tpu_custom_call.1} parent=1 // loop_footer_branch
      %20 = sbr.rel target = $region3
    $region8: #{tpu_custom_call.1} parent=1 // loop_exit
      _
    %586 = vsyncpa [#allocation5], 1
    %s587 = scalar_lea.sflag [#allocation5], 1
    %588 = vsyncpa %s587, 1
    %589 = vsyncpa [#allocation8], 1
    %s590 = scalar_lea.sflag [#allocation8], 1
    %591 = vsyncpa %s590, 1
    %592 = vsyncpa [#allocation6], 1
    %s593 = scalar_lea.sflag [#allocation6], 1
    %594 = vsyncpa %s593, 1

</llo_original>
